<compile_context>
chip_gen: v5e
topology: v5e:2x2
jax: 0.10.0
libtpu: 0.0.40
codegen_flags: <defaults>
</compile_context>

<pallas_src>
import math
import functools

import jax
import jax.numpy as jnp
from jax.experimental import pallas as pl
from jax.experimental.pallas import tpu as pltpu


# --------------------------------------------------------------------------
# Parameter setup (mirrors the registered buffer built in __init__)
# --------------------------------------------------------------------------
def _build_pe(max_len: int, d_model: int) -> jnp.ndarray:
    """Sinusoidal positional-encoding buffer -> (max_len, 1, d_model)."""
    position = jnp.arange(0, max_len, dtype=jnp.float32)[:, None]          # (L, 1)
    div_term = jnp.exp(jnp.arange(0, d_model, 2, dtype=jnp.float32)
                       * (-math.log(10000.0) / d_model))                   # (D/2,)
    pe = jnp.zeros((max_len, d_model), dtype=jnp.float32)
    pe = pe.at[:, 0::2].set(jnp.sin(position * div_term))
    pe = pe.at[:, 1::2].set(jnp.cos(position * div_term))
    return pe[:, None, :]                                                  # (L, 1, D)


def _dropout_threshold(p: float) -> int:
    # keep iff bits >= threshold  =>  P(keep) = 1 - p (exact to 2^-32)
    return min(int(round(p * (2.0 ** 32))), 2 ** 32 - 1)


# --------------------------------------------------------------------------
# Kernels
# --------------------------------------------------------------------------
def _pe_add_kernel(x_ref, pe_ref, o_ref):
    # x_ref: (ts, B, D) or (ts, B*D);  pe_ref broadcasts against it.
    o_ref[...] = (x_ref[...] + pe_ref[...]).astype(o_ref.dtype)


def _pe_add_dropout_kernel(x_ref, pe_ref, bits_ref, o_ref, *, threshold, inv_keep):
    y = x_ref[...] + pe_ref[...]
    keep = bits_ref[...] >= jnp.uint32(threshold)
    y = jnp.where(keep, y * jnp.asarray(inv_keep, y.dtype), jnp.zeros_like(y))
    o_ref[...] = y.astype(o_ref.dtype)


# --------------------------------------------------------------------------
# Wrapper
# --------------------------------------------------------------------------
def positional_encoding_forward(x: jnp.ndarray,
                                pe: jnp.ndarray,
                                *,
                                p: float = 0.1,
                                training: bool = False,
                                rng_key=None) -> jnp.ndarray:
    """x: (S, B, D);  pe: (max_len, 1, D).  Returns dropout(x + pe[:S])."""
    S, B, D = x.shape
    pe_slice = pe[:S].astype(x.dtype)                       # (S, 1, D)

    apply_dropout = training and p > 0.0
    if apply_dropout and p >= 1.0:
        return jnp.zeros_like(x)
    if apply_dropout:
        if rng_key is None:
            rng_key = jax.random.PRNGKey(0)
        # Dropout bits from a standard counter-based PRNG, streamed into the kernel.
        bits = jax.random.bits(rng_key, (S, B, D), jnp.uint32)
    else:
        bits = None

    # ---- lane/sublane-dense layout ---------------------------------------
    # Keep the 3-D (seq, batch, d_model) blocks only when the trailing dims are
    # already vreg-dense; otherwise flatten (batch, d_model) into one lane axis
    # so vector stores are unmasked (biggest single lever for this mem-bound op).
    use_3d = (D % 128 == 0) and (B % 8 == 0)
    if use_3d:
        x_in = x
        pe_in = pe_slice                                    # (S, 1, D): broadcast in-kernel
    else:
        x_in = x.reshape(S, B * D)
        pe_in = jnp.broadcast_to(pe_slice, (S, B, D)).reshape(S, B * D)
        if apply_dropout:
            bits = bits.reshape(S, B * D)

    # ---- byte-budgeted sequence tile --------------------------------------
    itemsize = jnp.dtype(x.dtype).itemsize
    row_bytes = max(B * D * itemsize, 1)
    # ~2 MiB per x block: amortizes per-step pipeline overhead while keeping the
    # double-buffered in/out/bits/pe footprint well under v7x's 64 MiB VMEM.
    # (On v5e/v6e with 128 MiB VMEM this can be raised towards 8-16 MiB.)
    target_block_bytes = 2 * 1024 * 1024
    ts = max(8, (target_block_bytes // row_bytes) // 8 * 8)
    if ts >= S:
        ts = S                                              # single block == full dims: always legal
        s_pad = S
    else:
        s_pad = -(-S // ts) * ts                            # pad S so the grid divides evenly
        if s_pad != S:
            pad_x = [(0, s_pad - S)] + [(0, 0)] * (x_in.ndim - 1)
            x_in = jnp.pad(x_in, pad_x)
            pe_in = jnp.pad(pe_in, [(0, s_pad - S)] + [(0, 0)] * (pe_in.ndim - 1))
            if apply_dropout:
                bits = jnp.pad(bits, pad_x)
    grid = (s_pad // ts,)

    if use_3d:
        x_spec = pl.BlockSpec((ts, B, D), lambda i: (i, 0, 0))
        pe_spec = pl.BlockSpec((ts, 1, D), lambda i: (i, 0, 0))
    else:
        x_spec = pl.BlockSpec((ts, B * D), lambda i: (i, 0))
        pe_spec = pl.BlockSpec((ts, B * D), lambda i: (i, 0))
    out_spec = x_spec

    compiler_params = pltpu.CompilerParams(
        # Seq tiles are fully independent (randomness is order-independent),
        # so "parallel" lets v7x shard the grid across both TensorCores.
        dimension_semantics=("parallel",),
        vmem_limit_bytes=32 * 1024 * 1024,
    )

    out_shape = jax.ShapeDtypeStruct(x_in.shape, x.dtype)

    if apply_dropout:
        kernel = functools.partial(_pe_add_dropout_kernel,
                                   threshold=_dropout_threshold(p),
                                   inv_keep=1.0 / (1.0 - p))
        out = pl.pallas_call(
            kernel,
            out_shape=out_shape,
            grid=grid,
            in_specs=[x_spec, pe_spec, x_spec],             # bits shares x's tiling
            out_specs=out_spec,
            compiler_params=compiler_params,
        )(x_in, pe_in, bits)
    else:
        out = pl.pallas_call(
            _pe_add_kernel,
            out_shape=out_shape,
            grid=grid,
            in_specs=[x_spec, pe_spec],
            out_specs=out_spec,
            compiler_params=compiler_params,
        )(x_in, pe_in)

    if out.shape[0] != S:
        out = out[:S]
    return out.reshape(S, B, D)


# --------------------------------------------------------------------------
# Self-test
# --------------------------------------------------------------------------
if __name__ == "__main__":
    seq_len, batch, d_model, max_len = 8, 2, 32, 64
    dropout_p = 0.1

    key = jax.random.PRNGKey(0)
    kx, kdrop = jax.random.split(key)
    x = jax.random.normal(kx, (seq_len, batch, d_model), dtype=jnp.float32)
    pe = _build_pe(max_len, d_model)

    ref = x + pe[:seq_len]

    # Eval mode (dropout = identity): exact match against plain-JAX reference.
    out_eval = jax.block_until_ready(
        positional_encoding_forward(x, pe, p=dropout_p, training=False))
    assert out_eval.shape == x.shape and out_eval.dtype == x.dtype
    assert jnp.allclose(out_eval, ref, atol=1e-6), "eval-mode mismatch vs reference"

    # Training mode: deterministic dropout mask derived from kdrop; replicate it here.
    out_train = jax.block_until_ready(
        positional_encoding_forward(x, pe, p=dropout_p, training=True, rng_key=kdrop))
    bits = jax.random.bits(kdrop, (seq_len, batch, d_model), jnp.uint32)
    keep = bits >= jnp.uint32(_dropout_threshold(dropout_p))
    ref_train = jnp.where(keep, ref * jnp.float32(1.0 / (1.0 - dropout_p)), 0.0)
    assert out_train.shape == x.shape and out_train.dtype == x.dtype
    assert bool(jnp.all(jnp.isfinite(out_train)))
    assert jnp.allclose(out_train, ref_train, atol=1e-5), "train-mode mismatch vs reference"

    print("KERNEL_OK")
</pallas_src>

<mosaic_0001>
module attributes {stable_mosaic.version = 11 : i64} {
  func.func @_pe_add_kernel(%arg0: i32, %arg1: memref<8x64xf32, #tpu.memory_space<vmem>>, %arg2: memref<8x64xf32, #tpu.memory_space<vmem>>, %arg3: memref<8x64xf32, #tpu.memory_space<vmem>>) attributes {dimension_semantics = [#tpu.dimension_semantics<parallel>], iteration_bounds = array<i64: 1>, scalar_prefetch = 0 : i64, scratch_operands = 0 : i64, tpu.core_type = #tpu.core_type<tc>, window_params = [{transform_indices = @transform_0, window_bounds = array<i64: 8, 64>}, {transform_indices = @transform_1, window_bounds = array<i64: 8, 64>}, {transform_indices = @transform_2, window_bounds = array<i64: 8, 64>}]} {
    %c0 = arith.constant 0 : index
    %c0_0 = arith.constant 0 : index
    %0 = vector.load %arg1[%c0, %c0_0] : memref<8x64xf32, #tpu.memory_space<vmem>>, vector<8x64xf32>
    %c0_1 = arith.constant 0 : index
    %c0_2 = arith.constant 0 : index
    %1 = vector.load %arg2[%c0_1, %c0_2] : memref<8x64xf32, #tpu.memory_space<vmem>>, vector<8x64xf32>
    %2 = arith.addf %0, %1 : vector<8x64xf32>
    %c0_3 = arith.constant 0 : index
    %c0_4 = arith.constant 0 : index
    %3 = vector.load %arg3[%c0_3, %c0_4] : memref<8x64xf32, #tpu.memory_space<vmem>>, vector<8x64xf32>
    tpu.vector_store %arg3[%c0_3, %c0_4], %2 {strides = array<i32>} : memref<8x64xf32, #tpu.memory_space<vmem>>, vector<8x64xf32>,
    return
  }
  func.func @transform_0(%arg0: i32) -> (i32, i32) {
    %c0_i32 = arith.constant 0 : i32
    %c0_i32_0 = arith.constant 0 : i32
    return %arg0, %c0_i32 : i32, i32
  }
  func.func @transform_1(%arg0: i32) -> (i32, i32) {
    %c0_i32 = arith.constant 0 : i32
    %c0_i32_0 = arith.constant 0 : i32
    return %arg0, %c0_i32 : i32, i32
  }
  func.func @transform_2(%arg0: i32) -> (i32, i32) {
    %c0_i32 = arith.constant 0 : i32
    %c0_i32_0 = arith.constant 0 : i32
    return %arg0, %c0_i32 : i32, i32
  }
}

</mosaic_0001>

<llo_original>
// kernel: tpu_custom_call.1
$region0: #{tpu_custom_call.1}
  #allocation0 [shape = 'u32[]', space=smem, size = 0x4, offset = 0x4, fixed_abs, tag = 'smem constant byte address 0x4 - core index']
  #allocation1 [shape = 'u32[72,128]{1,0:T(1,128)}', space=vmem, size = 0x9000, scoped, tag = 'internal scratch']
  %s0 = inlined_call_operand.hbm [shape: f32[8,64], index: 0, kind: input, shape index: {}]
  %s1 = inlined_call_operand.hbm [shape: f32[8,64], index: 1, kind: input, shape index: {}]
  %s2 = inlined_call_operand.hbm [shape: f32[8,64], index: 2, kind: output, shape index: {}]
  %s3 = sld [smem:[#allocation0]]
  $region26: #{tpu_custom_call.1} parent=0
    _
  %s5 = ssub.s32 1, %s3
  %s6 = scalar_select 0, %s5, %s3
  $region1: #{tpu_custom_call.1} parent=0
    #allocation2 [shape = 'u8[4096]{0}', space=vmem, size = 0x1000, scoped, tag = 'input window, operand 0, single buffered']
    #allocation3 [shape = 's32[1]{0}', space=sflag, size = 0x4, scoped, tag = 'scoped memory for tpu_custom_call.1']
    #allocation4 [shape = 's32[1]{0}', space=sflag, size = 0x4, scoped, tag = 'scoped memory for tpu_custom_call.1']
    #allocation5 [shape = 'u8[4096]{0}', space=vmem, size = 0x1000, scoped, tag = 'input window, operand 1, single buffered']
    #allocation6 [shape = 's32[1]{0}', space=sflag, size = 0x4, scoped, tag = 'scoped memory for tpu_custom_call.1']
    #allocation7 [shape = 'u8[4096]{0}', space=vmem, size = 0x1000, scoped, tag = 'output window, operand 0, single buffered']
    %7 = vsyncpa [#allocation3], 0
    %8 = vsyncpa [#allocation6], 0
    %9 = vsyncpa [#allocation4], 0
    // Predicated region
    $region2: #{tpu_custom_call.1} parent=1 // pred_check
      _
    $region3: #{tpu_custom_call.1} parent=1 // pred_check_branch
      %11 = sbr.rel (0) target = $region5
    $region4: #{tpu_custom_call.1} parent=1 // pred_region
      %13 = vsyncadd [#allocation3], 0
      %s15 = sshll.u32 %s0, 4
      %s16 = int_to_ptr.hbm [resolvable:$true] %s15
      %s17 = sshll.u32 [#allocation2], 4
      %s18 = int_to_ptr.vmem [resolvable:$true] %s17
      %20 = dma.hbm_to_vmem [thread:$0]  %s16, 128, %s18, [#allocation3]
    $region5: #{tpu_custom_call.1} parent=1 // pred_fallthru
      _
    // Predicated region
    $region6: #{tpu_custom_call.1} parent=1 // pred_check
      _
    $region7: #{tpu_custom_call.1} parent=1 // pred_check_branch
      %22 = sbr.rel (0) target = $region9
    $region8: #{tpu_custom_call.1} parent=1 // pred_region
      %24 = vsyncadd [#allocation6], 0
      %s26 = sshll.u32 %s1, 4
      %s27 = int_to_ptr.hbm [resolvable:$true] %s26
      %s28 = sshll.u32 [#allocation5], 4
      %s29 = int_to_ptr.vmem [resolvable:$true] %s28
      %31 = dma.hbm_to_vmem [thread:$0]  %s27, 128, %s29, [#allocation6]
    $region9: #{tpu_custom_call.1} parent=1 // pred_fallthru
      _
    // Predicated region
    $region10: #{tpu_custom_call.1} parent=1 // pred_check
      _
    $region11: #{tpu_custom_call.1} parent=1 // pred_check_branch
      %33 = sbr.rel (0) target = $region13
    $region12: #{tpu_custom_call.1} parent=1 // pred_region
      %35 = dma.done [#allocation3], 128
    $region13: #{tpu_custom_call.1} parent=1 // pred_fallthru
      _
    // Predicated region
    $region14: #{tpu_custom_call.1} parent=1 // pred_check
      _
    $region15: #{tpu_custom_call.1} parent=1 // pred_check_branch
      %37 = sbr.rel (0) target = $region17
    $region16: #{tpu_custom_call.1} parent=1 // pred_region
      %39 = dma.done [#allocation6], 128
    $region17: #{tpu_custom_call.1} parent=1 // pred_fallthru
      _
    %v40 = vld [vmem:[#allocation2] sm:$0xff]
    %v41 = vld [vmem:[#allocation5] sm:$0xff]
    %v42 = vadd.f32 %v40, %v41
    %vm43 = vcmask 523264
    %44 = vst.msk [vmem:[#allocation7] sm:$0xff] %vm43, %v42
    // Predicated region
    $region18: #{tpu_custom_call.1} parent=1 // pred_check
      _
    $region19: #{tpu_custom_call.1} parent=1 // pred_check_branch
      %46 = sbr.rel (0) target = $region21
    $region20: #{tpu_custom_call.1} parent=1 // pred_region
      %48 = vsyncadd [#allocation4], 0
      %s50 = sshll.u32 [#allocation7], 4
      %s51 = int_to_ptr.vmem [resolvable:$true] %s50
      %s52 = sshll.u32 %s2, 4
      %s53 = int_to_ptr.hbm [resolvable:$true] %s52
      %55 = dma.vmem_to_hbm [thread:$0]  %s51, 128, %s53, [#allocation4]
    $region21: #{tpu_custom_call.1} parent=1 // pred_fallthru
      _
    // Predicated region
    $region22: #{tpu_custom_call.1} parent=1 // pred_check
      _
    $region23: #{tpu_custom_call.1} parent=1 // pred_check_branch
      %57 = sbr.rel (0) target = $region25
    $region24: #{tpu_custom_call.1} parent=1 // pred_region
      %59 = dma.done [#allocation4], 128
    $region25: #{tpu_custom_call.1} parent=1 // pred_fallthru
      _
    %60 = vsyncpa [#allocation3], 1
    %61 = vsyncpa [#allocation6], 1
    %62 = vsyncpa [#allocation4], 1

</llo_original>
